<compile_context>
chip_gen: v7x
topology: tpu7x:2x2x1
jax: 0.10.0
libtpu: 0.0.40
codegen_flags: <defaults>
</compile_context>

<pallas_src>
import functools
import math

import jax
import jax.numpy as jnp
from jax import lax
from jax.experimental import pallas as pl
from jax.experimental.pallas import tpu as pltpu


def _round_up(x: int, mult: int) -> int:
    return (x + mult - 1) // mult * mult


def _arc_margin_kernel(x_ref, lbl_ref, wt_ref, o_ref, wn_ref, *,
                       s, cos_m, sin_m, th, mm, easy_margin, tile_n):
    """Fused: normalize rows + weight cols -> GEMM -> margin -> label select -> scale."""
    j = pl.program_id(0)          # class-tile axis (outer, "parallel")
    i = pl.program_id(1)          # batch-tile axis (inner, "arbitrary")

    # Normalize this weight tile once per class tile.  Its block index is
    # constant along i, so it is HBM-fetched once and the normalized copy in
    # the persistent VMEM scratch is reused for every batch tile.
    @pl.when(i == 0)
    def _():
        w = wt_ref[...].astype(jnp.float32)                          # (K, tile_n)
        inv_wn = lax.rsqrt(
            jnp.maximum(jnp.sum(w * w, axis=0, keepdims=True), 1e-24))
        wn_ref[...] = w * inv_wn

    # Row-wise L2 normalization of the input tile (== F.normalize, eps=1e-12):
    # x * rsqrt(max(||x||^2, eps^2)) == x / max(||x||, eps).
    x = x_ref[...].astype(jnp.float32)                               # (tile_m, K)
    inv_xn = lax.rsqrt(
        jnp.maximum(jnp.sum(x * x, axis=1, keepdims=True), 1e-24))
    xn = x * inv_xn

    # Single MXU GEMM against the resident normalized weight tile.
    cosine = jnp.dot(xn, wn_ref[...], preferred_element_type=jnp.float32)

    # Margin math: VPU/EUP elementwise, rides alongside the MXU.
    sine = jnp.sqrt(jnp.maximum(1.0 - cosine * cosine, 0.0))
    phi = cosine * cos_m - sine * sin_m
    if easy_margin:
        phi = jnp.where(cosine > 0.0, phi, cosine)
    else:
        phi = jnp.where(cosine > th, phi, cosine - mm)

    # one_hot scatter fused as a (global column index == label) compare/select.
    col = lax.broadcasted_iota(jnp.int32, cosine.shape, 1) + j * tile_n
    one_hot = col == lbl_ref[...]                                    # (tile_m, 1) bcast
    o_ref[...] = (jnp.where(one_hot, phi, cosine) * s).astype(o_ref.dtype)


def complex_arc_margin_product(x, weight, label, *, s=30.0, m=0.5,
                               easy_margin=False,
                               tile_m_max=512, tile_n_max=1024):
    """x: (B, in_features); weight: (out_features, in_features); label: (B,)."""
    B, K = x.shape
    N, K2 = weight.shape
    assert K == K2, "weight/in_features mismatch"

    # Lane-dense columns (mult of 128) and sublane-aligned rows (mult of 8).
    N128 = _round_up(max(N, 128), 128)
    M8 = _round_up(max(B, 8), 8)
    tile_m = min(tile_m_max, M8)
    tile_n = min(tile_n_max, N128)

    # Keep double-buffered blocks + scratch comfortably inside scoped VMEM
    # (safe on v7x's 64 MiB physical VMEM as well as v5e/v6e).
    def vmem_bytes(tm, tn):
        # x, weight, out double-buffered + normalized-weight scratch + labels.
        return 4 * (2 * tm * K + 2 * K * tn + 2 * tm * tn + K * tn + 2 * tm)

    budget = 24 * 1024 * 1024
    while vmem_bytes(tile_m, tile_n) > budget and tile_m > 8:
        tile_m = max(8, _round_up(tile_m // 2, 8))
    while vmem_bytes(tile_m, tile_n) > budget and tile_n > 128:
        tile_n = max(128, _round_up(tile_n // 2, 128))

    M_pad = _round_up(M8, tile_m)
    N_pad = _round_up(N128, tile_n)

    # Layout plumbing only (pad + transpose); all math happens inside the kernel.
    x_pad = jnp.zeros((M_pad, K), x.dtype).at[:B].set(x)
    wt_pad = jnp.zeros((K, N_pad), jnp.float32).at[:, :N].set(
        weight.astype(jnp.float32).T)
    lbl_pad = jnp.zeros((M_pad, 1), jnp.int32).at[:B, 0].set(label.astype(jnp.int32))

    kernel = functools.partial(
        _arc_margin_kernel,
        s=float(s),
        cos_m=math.cos(m),
        sin_m=math.sin(m),
        th=math.cos(math.pi - m),
        mm=math.sin(math.pi - m) * m,
        easy_margin=bool(easy_margin),
        tile_n=tile_n,
    )

    out = pl.pallas_call(
        kernel,
        out_shape=jax.ShapeDtypeStruct((M_pad, N_pad), jnp.float32),
        grid_spec=pltpu.PrefetchScalarGridSpec(
            num_scalar_prefetch=0,
            grid=(N_pad // tile_n, M_pad // tile_m),      # (class tiles, batch tiles)
            in_specs=[
                pl.BlockSpec((tile_m, K), lambda j, i: (i, 0)),     # input rows
                pl.BlockSpec((tile_m, 1), lambda j, i: (i, 0)),     # labels
                pl.BlockSpec((K, tile_n), lambda j, i: (0, j)),     # weight.T tile
            ],
            out_specs=pl.BlockSpec((tile_m, tile_n), lambda j, i: (i, j)),
            scratch_shapes=[pltpu.VMEM((K, tile_n), jnp.float32)],  # normalized W tile
        ),
        compiler_params=pltpu.CompilerParams(
            # Class-tile axis is embarrassingly parallel (megacore-splittable);
            # the batch axis carries the "normalize once at i==0" scratch
            # dependency, so it stays "arbitrary".
            dimension_semantics=("parallel", "arbitrary"),
            vmem_limit_bytes=32 * 1024 * 1024,
        ),
    )(x_pad, lbl_pad, wt_pad)

    return out[:B, :N]


def _ref_forward(x, weight, label, s, m, easy_margin):
    """Pure-JAX reference mirroring the PyTorch module."""
    xn = x / jnp.maximum(jnp.linalg.norm(x, axis=1, keepdims=True), 1e-12)
    wn = weight / jnp.maximum(jnp.linalg.norm(weight, axis=1, keepdims=True), 1e-12)
    cosine = xn @ wn.T
    sine = jnp.sqrt(jnp.maximum(1.0 - cosine ** 2, 0.0))
    phi = cosine * math.cos(m) - sine * math.sin(m)
    if easy_margin:
        phi = jnp.where(cosine > 0.0, phi, cosine)
    else:
        th = math.cos(math.pi - m)
        mm = math.sin(math.pi - m) * m
        phi = jnp.where(cosine > th, phi, cosine - mm)
    one_hot = jax.nn.one_hot(label, weight.shape[0], dtype=cosine.dtype)
    return (one_hot * phi + (1.0 - one_hot) * cosine) * s


if __name__ == "__main__":
    B, in_features, out_features = 8, 32, 100   # out padded to 128 inside
    s_param, m_param, easy_margin = 30.0, 0.5, False

    key = jax.random.PRNGKey(0)
    kx, kw, kl = jax.random.split(key, 3)
    x = jax.random.normal(kx, (B, in_features), dtype=jnp.float32)
    # xavier_uniform_ init for the (out, in) weight.
    bound = math.sqrt(6.0 / (in_features + out_features))
    weight = jax.random.uniform(kw, (out_features, in_features),
                                jnp.float32, -bound, bound)
    label = jax.random.randint(kl, (B,), 0, out_features, dtype=jnp.int32)

    out = complex_arc_margin_product(x, weight, label,
                                     s=s_param, m=m_param,
                                     easy_margin=easy_margin)
    out = jax.block_until_ready(out)

    ref = _ref_forward(x, weight, label, s_param, m_param, easy_margin)

    assert out.shape == (B, out_features), out.shape
    assert jnp.allclose(out, ref, atol=1e-4, rtol=1e-4), "mismatch vs reference"
    print("KERNEL_OK")
</pallas_src>

<mosaic_0001>
module attributes {stable_mosaic.version = 11 : i64} {
  func.func @_arc_margin_kernel(%arg0: i32, %arg1: i32, %arg2: memref<8x32xf32, #tpu.memory_space<vmem>>, %arg3: memref<8x1xi32, #tpu.memory_space<vmem>>, %arg4: memref<32x128xf32, #tpu.memory_space<vmem>>, %arg5: memref<8x128xf32, #tpu.memory_space<vmem>>, %arg6: memref<32x128xf32, #tpu.memory_space<vmem>>) attributes {dimension_semantics = [#tpu.dimension_semantics<parallel>, #tpu.dimension_semantics<arbitrary>], iteration_bounds = array<i64: 1, 1>, scalar_prefetch = 0 : i64, scratch_operands = 1 : i64, tpu.core_type = #tpu.core_type<tc>, window_params = [{transform_indices = @transform_0, window_bounds = array<i64: 8, 32>}, {transform_indices = @transform_1, window_bounds = array<i64: 8, 1>}, {transform_indices = @transform_2, window_bounds = array<i64: 32, 128>}, {transform_indices = @transform_3, window_bounds = array<i64: 8, 128>}]} {
    %c0_i32 = arith.constant 0 : i32
    %0 = arith.cmpi eq, %arg1, %c0_i32 : i32
    %1 = arith.extui %0 : i1 to i32
    %c0_i32_0 = arith.constant 0 : i32
    %2 = arith.cmpi ne, %1, %c0_i32_0 : i32
    scf.if %2 {
      %c0_17 = arith.constant 0 : index
      %c0_18 = arith.constant 0 : index
      %41 = vector.load %arg4[%c0_17, %c0_18] : memref<32x128xf32, #tpu.memory_space<vmem>>, vector<32x128xf32>
      %42 = arith.mulf %41, %41 : vector<32x128xf32>
      %cst_19 = arith.constant dense<0.000000e+00> : vector<128xf32>
      %43 = vector.multi_reduction <add>, %42, %cst_19 [0] : vector<32x128xf32> to vector<128xf32>
      %44 = vector.shape_cast %43 : vector<128xf32> to vector<1x128xf32>
      %cst_20 = arith.constant 1.000000e-24 : f32
      %45 = vector.broadcast %cst_20 : f32 to vector<1x128xf32>
      %46 = arith.maximumf %44, %45 : vector<1x128xf32>
      %47 = math.rsqrt %46 : vector<1x128xf32>
      %48 = vector.broadcast %47 : vector<1x128xf32> to vector<32x128xf32>
      %49 = arith.mulf %41, %48 : vector<32x128xf32>
      %c0_21 = arith.constant 0 : index
      %c0_22 = arith.constant 0 : index
      %50 = vector.load %arg6[%c0_21, %c0_22] : memref<32x128xf32, #tpu.memory_space<vmem>>, vector<32x128xf32>
      tpu.vector_store %arg6[%c0_21, %c0_22], %49 {strides = array<i32>} : memref<32x128xf32, #tpu.memory_space<vmem>>, vector<32x128xf32>,
    } else {
    }
    %c0 = arith.constant 0 : index
    %c0_1 = arith.constant 0 : index
    %3 = vector.load %arg2[%c0, %c0_1] : memref<8x32xf32, #tpu.memory_space<vmem>>, vector<8x32xf32>
    %4 = arith.mulf %3, %3 : vector<8x32xf32>
    %cst = arith.constant dense<0.000000e+00> : vector<8xf32>
    %5 = vector.multi_reduction <add>, %4, %cst [1] : vector<8x32xf32> to vector<8xf32>
    %6 = vector.shape_cast %5 : vector<8xf32> to vector<8x1xf32>
    %cst_2 = arith.constant 1.000000e-24 : f32
    %7 = vector.broadcast %cst_2 : f32 to vector<8x1xf32>
    %8 = arith.maximumf %6, %7 : vector<8x1xf32>
    %9 = math.rsqrt %8 : vector<8x1xf32>
    %10 = vector.broadcast %9 : vector<8x1xf32> to vector<8x32xf32>
    %11 = arith.mulf %3, %10 : vector<8x32xf32>
    %c0_3 = arith.constant 0 : index
    %c0_4 = arith.constant 0 : index
    %12 = vector.load %arg6[%c0_3, %c0_4] : memref<32x128xf32, #tpu.memory_space<vmem>>, vector<32x128xf32>
    %cst_5 = arith.constant dense<0.000000e+00> : vector<8x128xf32>
    %13 = tpu.matmul %11, %12, %cst_5 {dimension_numbers = #tpu.dot_dimension_numbers<[1], [0], [0], [1], [0, 0, 1, 1], [], []>} : vector<8x32xf32>, vector<32x128xf32>, vector<8x128xf32> -> vector<8x128xf32>
    %14 = arith.mulf %13, %13 : vector<8x128xf32>
    %cst_6 = arith.constant 1.000000e+00 : f32
    %15 = vector.broadcast %cst_6 : f32 to vector<8x128xf32>
    %16 = arith.subf %15, %14 : vector<8x128xf32>
    %cst_7 = arith.constant 0.000000e+00 : f32
    %17 = vector.broadcast %cst_7 : f32 to vector<8x128xf32>
    %18 = arith.maximumf %16, %17 : vector<8x128xf32>
    %19 = math.sqrt %18 : vector<8x128xf32>
    %cst_8 = arith.constant 0.87758255 : f32
    %20 = vector.broadcast %cst_8 : f32 to vector<8x128xf32>
    %21 = arith.mulf %13, %20 : vector<8x128xf32>
    %cst_9 = arith.constant 0.47942555 : f32
    %22 = vector.broadcast %cst_9 : f32 to vector<8x128xf32>
    %23 = arith.mulf %19, %22 : vector<8x128xf32>
    %24 = arith.subf %21, %23 : vector<8x128xf32>
    %cst_10 = arith.constant -0.87758255 : f32
    %25 = vector.broadcast %cst_10 : f32 to vector<8x128xf32>
    %26 = arith.cmpf ogt, %13, %25 : vector<8x128xf32>
    %cst_11 = arith.constant 0.239712775 : f32
    %27 = vector.broadcast %cst_11 : f32 to vector<8x128xf32>
    %28 = arith.subf %13, %27 : vector<8x128xf32>
    %29 = arith.select %26, %24, %28 : vector<8x128xi1>, vector<8x128xf32>
    %30 = tpu.iota {dimensions = array<i32: 1>} : vector<8x128xi32>
    %c128_i32 = arith.constant 128 : i32
    %31 = arith.muli %arg0, %c128_i32 : i32
    %32 = vector.broadcast %31 : i32 to vector<8x128xi32>
    %33 = arith.addi %30, %32 : vector<8x128xi32>
    %c0_12 = arith.constant 0 : index
    %c0_13 = arith.constant 0 : index
    %34 = vector.load %arg3[%c0_12, %c0_13] : memref<8x1xi32, #tpu.memory_space<vmem>>, vector<8x1xi32>
    %35 = vector.broadcast %34 : vector<8x1xi32> to vector<8x128xi32>
    %36 = arith.cmpi eq, %33, %35 : vector<8x128xi32>
    %37 = arith.select %36, %29, %13 : vector<8x128xi1>, vector<8x128xf32>
    %cst_14 = arith.constant 3.000000e+01 : f32
    %38 = vector.broadcast %cst_14 : f32 to vector<8x128xf32>
    %39 = arith.mulf %37, %38 : vector<8x128xf32>
    %c0_15 = arith.constant 0 : index
    %c0_16 = arith.constant 0 : index
    %40 = vector.load %arg5[%c0_15, %c0_16] : memref<8x128xf32, #tpu.memory_space<vmem>>, vector<8x128xf32>
    tpu.vector_store %arg5[%c0_15, %c0_16], %39 {strides = array<i32>} : memref<8x128xf32, #tpu.memory_space<vmem>>, vector<8x128xf32>,
    return
  }
  func.func @transform_0(%arg0: i32, %arg1: i32) -> (i32, i32) {
    %c0_i32 = arith.constant 0 : i32
    %c0_i32_0 = arith.constant 0 : i32
    return %arg1, %c0_i32 : i32, i32
  }
  func.func @transform_1(%arg0: i32, %arg1: i32) -> (i32, i32) {
    %c0_i32 = arith.constant 0 : i32
    %c0_i32_0 = arith.constant 0 : i32
    return %arg1, %c0_i32 : i32, i32
  }
  func.func @transform_2(%arg0: i32, %arg1: i32) -> (i32, i32) {
    %c0_i32 = arith.constant 0 : i32
    %c0_i32_0 = arith.constant 0 : i32
    return %c0_i32, %arg0 : i32, i32
  }
  func.func @transform_3(%arg0: i32, %arg1: i32) -> (i32, i32) {
    %c0_i32 = arith.constant 0 : i32
    return %arg1, %arg0 : i32, i32
  }
}

</mosaic_0001>

<llo_original>
// kernel: tpu_custom_call.1
$region0: #{tpu_custom_call.1}
  #allocation0 [shape = 'u32[]', space=smem, size = 0x4, offset = 0x4, fixed_abs, tag = 'smem constant byte address 0x4 - core index']
  #allocation1 [shape = 'u32[144,128]{1,0:T(1,128)}', space=vmem, size = 0x12000, scoped, tag = 'internal scratch']
  #allocation2 [shape = 'f32[32,128]{1,0:T(8,128)}', space=vmem, size = 0x4000, scoped, tag = 'scratch operand']
  %s0 = inlined_call_operand.vmem [shape: f32[8,32], index: 0, kind: input, shape index: {}]
  %s1 = inlined_call_operand.vmem [shape: s32[8,1], index: 1, kind: input, shape index: {}]
  %s2 = inlined_call_operand.hbm [shape: f32[32,128], index: 2, kind: input, shape index: {}]
  %s3 = inlined_call_operand.hbm [shape: f32[8,128], index: 3, kind: output, shape index: {}]
  %s4 = sld [smem:[#allocation0]]
  $region30: #{tpu_custom_call.1} parent=0
    _
  %s6 = ssub.s32 1, %s4
  %s7 = scalar_select 0, %s6, %s4
  $region1: #{tpu_custom_call.1} parent=0
    #allocation3 [shape = 'u8[16384]{0}', space=vmem, size = 0x4000, scoped, tag = 'input window, operand 2, single buffered']
    #allocation4 [shape = 's32[1]{0}', space=sflag, size = 0x4, scoped, tag = 'scoped memory for tpu_custom_call.1']
    #allocation5 [shape = 's32[1]{0}', space=sflag, size = 0x4, scoped, tag = 'scoped memory for tpu_custom_call.1']
    #allocation6 [shape = 'u8[4096]{0}', space=vmem, size = 0x1000, scoped, tag = 'output window, operand 0, single buffered']
    %8 = vsyncpa [#allocation4], 0
    %9 = vsyncpa [#allocation5], 0
    // Predicated region
    $region2: #{tpu_custom_call.1} parent=1 // pred_check
      _
    $region3: #{tpu_custom_call.1} parent=1 // pred_check_branch
      %11 = sbr.rel (0) target = $region5
    $region4: #{tpu_custom_call.1} parent=1 // pred_region
      _
    $region5: #{tpu_custom_call.1} parent=1 // pred_fallthru
      _
    // Predicated region
    $region6: #{tpu_custom_call.1} parent=1 // pred_check
      _
    $region7: #{tpu_custom_call.1} parent=1 // pred_check_branch
      %13 = sbr.rel (0) target = $region9
    $region8: #{tpu_custom_call.1} parent=1 // pred_region
      _
    $region9: #{tpu_custom_call.1} parent=1 // pred_fallthru
      _
    // Predicated region
    $region10: #{tpu_custom_call.1} parent=1 // pred_check
      _
    $region11: #{tpu_custom_call.1} parent=1 // pred_check_branch
      %15 = sbr.rel (0) target = $region13
    $region12: #{tpu_custom_call.1} parent=1 // pred_region
      %s17 = ssub.s32 512, 512
      %18 = vsyncadd [#allocation4], %s17
      %s19 = sshll.u32 [#allocation3], 4
      %s20 = int_to_ptr.vmem [resolvable:$true] %s19
      %25 = dma.hbm_to_vmem [thread:$0]  %s2, 512, %s20, [#allocation4], 128, 128, 8
    $region13: #{tpu_custom_call.1} parent=1 // pred_fallthru
      _
    // Predicated region
    $region14: #{tpu_custom_call.1} parent=1 // pred_check
      _
    $region15: #{tpu_custom_call.1} parent=1 // pred_check_branch
      %27 = sbr.rel (0) target = $region17
    $region16: #{tpu_custom_call.1} parent=1 // pred_region
      %28 = dma.done [#allocation4], 512
    $region17: #{tpu_custom_call.1} parent=1 // pred_fallthru
      _
    %p29 = scmp.eq.s32.totalorder 0, 0
    // Predicated region
    $region18: #{tpu_custom_call.1} parent=1 // pred_check
      %p30 = pneg %p29
    $region19: #{tpu_custom_call.1} parent=1 // pred_check_branch
      %32 = sbr.rel (%p30) target = $region21
    $region20: #{tpu_custom_call.1} parent=1 // pred_region
      %v33 = vld [vmem:[#allocation3] sm:$0xff]
      %v34 = vld [vmem:[#allocation3 + $0x8] sm:$0xff]
      %v35 = vld [vmem:[#allocation3 + $0x10] sm:$0xff]
      %v36 = vld [vmem:[#allocation3 + $0x18] sm:$0xff]
      %v37 = vmul.f32 %v33, %v33
      %v38 = vmul.f32 %v34, %v34
      %v39 = vmul.f32 %v35, %v35
      %v40 = vmul.f32 %v36, %v36
      %v41 = vadd.f32 %v37, %v38
      %v42 = vadd.f32 %v41, %v39
      %v43 = vadd.f32 %v42, %v40
      %v44 = vrot.slane %v43, 4
      %v45 = vadd.f32 %v43, %v44
      %v46 = vrot.slane %v45, 2
      %v47 = vadd.f32 %v45, %v46
      %v48 = vrot.slane %v47, 1
      %v49 = vadd.f32 %v47, %v48
      %v50 = vmax.f32 %v49, 1e-24
      %v51 = vrsqrt.pop %v50
      %v52 = vmul.f32 %v33, %v51
      %v53 = vmul.f32 %v34, %v51
      %v54 = vmul.f32 %v35, %v51
      %v55 = vmul.f32 %v36, %v51
      %56 = vst [vmem:[#allocation2] sm:$0xff] %v52
      %57 = vst [vmem:[#allocation2 + $0x8] sm:$0xff] %v53
      %58 = vst [vmem:[#allocation2 + $0x10] sm:$0xff] %v54
      %59 = vst [vmem:[#allocation2 + $0x18] sm:$0xff] %v55
    $region21: #{tpu_custom_call.1} parent=1 // pred_fallthru
      _
    %v60 = vld [vmem:[%s0] sm:$0xff]
    %v61 = vmul.f32 %v60, %v60
    %vm62 = vcmask 261120
    %v63 = vsel %vm62, %v61, 0.0
    %64 = vadd.xlane.f32.xlu0 %v63
    %v65 = vpop.xlane.xlu0 %64
    %v66 = vmax.f32 %v65, 1e-24
    %v67 = vrsqrt.pop %v66
    %v68 = vmul.f32 %v60, %v67
    %v69 = vld [vmem:[#allocation2] sm:$0xff]
    %v70 = vld [vmem:[#allocation2 + $0x8] sm:$0xff]
    %v71 = vld [vmem:[#allocation2 + $0x10] sm:$0xff]
    %v72 = vld [vmem:[#allocation2 + $0x18] sm:$0xff]
    %v74 = vsel %vm62, %v68, 0
    %76 = vmatprep.subr.mxu0 0.0
    %77 = vmatpush1.msra.mxu0 %v69
    %78 = vmatprep.subr.mxu0 0.0
    %79 = vmatpush1.msra.mxu0 %v70
    %80 = vmatprep.subr.mxu0 0.0
    %81 = vmatpush1.msra.mxu0 %v71
    %82 = vmatprep.subr.mxu0 0.0
    %83 = vmatpush1.msra.mxu0 %v72
    %84 = vmatprep.subr.mxu0 0.0
    %85 = vmatpush1.msra.mxu0 0.0
    %86 = vmatprep.subr.mxu0 0.0
    %87 = vmatpush1.msra.mxu0 0.0
    %88 = vmatprep.subr.mxu0 0.0
    %89 = vmatpush1.msra.mxu0 0.0
    %90 = vmatprep.subr.mxu0 0.0
    %91 = vmatpush1.msra.mxu0 0.0
    %92 = vmatprep.subr.mxu0 0.0
    %93 = vmatpush1.msra.mxu0 0.0
    %94 = vmatprep.subr.mxu0 0.0
    %95 = vmatpush1.msra.mxu0 0.0
    %96 = vmatprep.subr.mxu0 0.0
    %97 = vmatpush1.msra.mxu0 0.0
    %98 = vmatprep.subr.mxu0 0.0
    %99 = vmatpush1.msra.mxu0 0.0
    %100 = vmatprep.subr.mxu0 0.0
    %101 = vmatpush1.msra.mxu0 0.0
    %102 = vmatprep.subr.mxu0 0.0
    %103 = vmatpush1.msra.mxu0 0.0
    %104 = vmatprep.subr.mxu0 0.0
    %105 = vmatpush1.msra.mxu0 0.0
    %106 = vmatprep.subr.mxu0 0.0
    %107 = vmatpush1.msra.mxu0 0.0
    %108 = vmatprep.subr.mxu0 0.0
    %109 = vmatpush1.msra.mxu0 0.0
    %110 = vmatprep.subr.mxu0 0.0
    %111 = vmatpush1.msra.mxu0 0.0
    %112 = vmatprep.subr.mxu0 0.0
    %113 = vmatpush1.msra.mxu0 0.0
    %114 = vmatprep.subr.mxu0 0.0
    %115 = vmatpush1.msra.mxu0 0.0
    %116 = vmatprep.subr.mxu0 0.0
    %117 = vmatpush1.msra.mxu0 0.0
    %118 = vmatprep.subr.mxu0 0.0
    %119 = vmatpush1.msra.mxu0 0.0
    %120 = vmatprep.subr.mxu0 0.0
    %121 = vmatpush1.msra.mxu0 0.0
    %122 = vmatprep.subr.mxu0 0.0
    %123 = vmatpush1.msra.mxu0 0.0
    %124 = vmatprep.subr.mxu0 0.0
    %125 = vmatpush1.msra.mxu0 0.0
    %126 = vmatprep.subr.mxu0 0.0
    %127 = vmatpush1.msra.mxu0 0.0
    %128 = vmatprep.subr.mxu0 0.0
    %129 = vmatpush1.msra.mxu0 0.0
    %130 = vmatprep.subr.mxu0 0.0
    %131 = vmatpush1.msra.mxu0 0.0
    %132 = vmatprep.subr.mxu0 0.0
    %133 = vmatpush1.msra.mxu0 0.0
    %134 = vmatprep.subr.mxu0 0.0
    %135 = vmatpush1.msra.mxu0 0.0
    %136 = vmatprep.subr.mxu0 0.0
    %137 = vmatpush1.msra.mxu0 0.0
    %138 = vmatprep.subr.mxu0 0.0
    %139 = vmatpush1.msra.mxu0 0.0
    %140 = vmatprep.mubr.f32.mxu0 0.0
    %141 = vmatmul.mubr.f32.gmra.mrb[0].mxu0 %v74
    %v142 = vpop.f32.mrb[0].mxu0
    %v143 = vadd.f32 0.0, %v142
    %v144 = vpop.f32.mrb[0].mxu0
    %145 = vdwg.mxu0
    %v146 = vmul.f32 %v143, %v143
    %v147 = vsub.f32 1.0, %v146
    %v148 = vmax.f32 %v147, 0.0
    %v149 = vrsqrt.pop %v148
    %v150 = vmul.f32 %v148, %v149
    %vm151 = vcmp.eq.f32.partialorder %v148, inf
    %v152 = vsel %vm151, %v148, %v150
    %vm153 = vcmp.eq.f32.partialorder %v148, 0.0
    %v154 = vand.u32 %v148, 2147483648
    %v155 = vsel %vm153, %v154, %v152
    %v156 = vmul.f32 %v143, 0.87758255
    %v157 = vmul.f32 %v155, 0.47942555
    %v158 = vsub.f32 %v156, %v157
    %vm159 = vcmp.gt.f32.partialorder %v143, -0.87758255
    %v160 = vsub.f32 %v143, 0.23971277
    %v161 = vsel %vm159, %v158, %v160
    %v162 = vlaneseq
    %v163 = vand.u32 %v162, 127
    %s164 = smul.u32 0, 128
    %v165 = vstv %s164
    %v166 = vadd.s32 %v163, %v165
    %v167 = vld [vmem:[%s1] sm:$0xff]
    %168 = vset.pattern.permute.xlu0 0
    %169 = vperm.xlu0 %168, %v167
    %v170 = vpop.permute.xlu0 %169
    %vm171 = vcmp.eq.s32.totalorder %v166, %v170
    %v172 = vsel %vm171, %v161, %v143
    %v173 = vmul.f32 %v172, 30.0
    %174 = vst [vmem:[#allocation6] sm:$0xff] %v173
    // Predicated region
    $region22: #{tpu_custom_call.1} parent=1 // pred_check
      _
    $region23: #{tpu_custom_call.1} parent=1 // pred_check_branch
      %176 = sbr.rel (0) target = $region25
    $region24: #{tpu_custom_call.1} parent=1 // pred_region
      %s178 = ssub.s32 128, 128
      %179 = vsyncadd [#allocation5], %s178
      %s181 = sshll.u32 [#allocation6], 4
      %s182 = int_to_ptr.vmem [resolvable:$true] %s181
      %184 = dma.vmem_to_hbm [thread:$0]  %s182, 128, %s3, [#allocation5]
    $region25: #{tpu_custom_call.1} parent=1 // pred_fallthru
      _
    // Predicated region
    $region26: #{tpu_custom_call.1} parent=1 // pred_check
      _
    $region27: #{tpu_custom_call.1} parent=1 // pred_check_branch
      %186 = sbr.rel (0) target = $region29
    $region28: #{tpu_custom_call.1} parent=1 // pred_region
      %187 = dma.done [#allocation5], 128
    $region29: #{tpu_custom_call.1} parent=1 // pred_fallthru
      _
    %188 = vsyncpa [#allocation4], 1
    %189 = vsyncpa [#allocation5], 1

</llo_original>
